<compile_context>
chip_gen: v5e
topology: v5e:2x2
jax: 0.10.0
libtpu: 0.0.40
codegen_flags: <defaults>
</compile_context>

<pallas_src>
import functools

import jax
import jax.numpy as jnp
from jax import lax
from jax.experimental import pallas as pl
from jax.experimental.pallas import tpu as pltpu


def _chip_props():
    """Best-effort TPU-generation detection (static Python-time decision).

    Returns (two_tensorcores, target_block_bytes).
    """
    kind = ""
    try:
        kind = jax.devices()[0].device_kind.lower()
    except Exception:
        pass
    two_tc = "v7" in kind  # v7x: 2 TensorCores/chip; v5e/v6e: 1
    if "v5 lite" in kind or "v5e" in kind or "v5lite" in kind:
        target_block_bytes = 2 * 1024 * 1024   # v5e: smaller scoped-VMEM default
    else:
        target_block_bytes = 4 * 1024 * 1024   # v6e / v7x
    return two_tc, target_block_bytes


def _activation_kernel(x_ref, o_ref, *, activation):
    x = x_ref[...]
    if activation == "relu":
        # dtype-preserving relu (no float promotion for integer inputs)
        o_ref[...] = jnp.maximum(x, jnp.zeros((), dtype=x.dtype))
    else:  # "gelu": nn.GELU() default = exact erf formulation, f32 math.
        xf = x.astype(jnp.float32)
        inv_sqrt2 = jnp.float32(0.7071067811865476)
        y = 0.5 * xf * (1.0 + lax.erf(xf * inv_sqrt2))
        o_ref[...] = y.astype(o_ref.dtype)


def _eltwise_jnp(x, activation):
    """Plain-jnp path for tiny unaligned tails (< cols elements)."""
    if activation == "relu":
        return jnp.maximum(x, jnp.zeros((), dtype=x.dtype))
    xf = x.astype(jnp.float32)
    return (0.5 * xf * (1.0 + lax.erf(xf * jnp.float32(0.7071067811865476)))
            ).astype(x.dtype)


def _round_down(v, m):
    return (v // m) * m


def _run_2d(x2d, activation, two_tc, target_block_bytes):
    rows, cols = x2d.shape
    dtype = x2d.dtype
    itemsize = jnp.dtype(dtype).itemsize
    bytes_per_row = cols * itemsize
    # dtype-aware sublane packing: 8 rows (f32), 16 (bf16/f16), 32 (int8/fp8)
    sub = max(8, 32 // itemsize)

    if rows < sub:
        row_tile = rows  # block dim == full array dim (allowed)
    else:
        row_tile = min(rows, max(sub, target_block_bytes // bytes_per_row))
        row_tile = max(sub, _round_down(row_tile, sub))

    grid = pl.cdiv(rows, row_tile)

    if two_tc:
        # Feed both TensorCores: force >= 2 steps on medium tensors...
        if grid == 1 and rows >= 2 * sub and rows * bytes_per_row > (1 << 20):
            row_tile = max(sub, _round_down(rows // 2, sub))
            grid = pl.cdiv(rows, row_tile)
        # ...and prefer an even step count when the grid is short, so the
        # "parallel" axis splits evenly across the two cores.
        if 1 < grid < 8 and grid % 2 == 1:
            for g in (grid + 1, grid - 1):
                if g < 2 or g % 2 != 0:
                    continue
                rt = max(sub, ((pl.cdiv(rows, g) + sub - 1) // sub) * sub)
                if (rt <= rows
                        and rt * bytes_per_row <= (target_block_bytes * 3) // 2
                        and pl.cdiv(rows, rt) % 2 == 0):
                    row_tile = rt
                    grid = pl.cdiv(rows, rt)
                    break

    kernel = functools.partial(_activation_kernel, activation=activation)
    n = rows * cols
    cost = pl.CostEstimate(
        flops=(1 if activation == "relu" else 10) * n,
        transcendentals=0 if activation == "relu" else n,
        bytes_accessed=2 * n * itemsize,
    )

    return pl.pallas_call(
        kernel,
        out_shape=jax.ShapeDtypeStruct((rows, cols), dtype),
        grid_spec=pltpu.PrefetchScalarGridSpec(
            num_scalar_prefetch=0,
            grid=(grid,),
            in_specs=[pl.BlockSpec((row_tile, cols), lambda i: (i, 0))],
            out_specs=pl.BlockSpec((row_tile, cols), lambda i: (i, 0)),
        ),
        compiler_params=pltpu.CompilerParams(
            dimension_semantics=("parallel",),
            vmem_limit_bytes=32 * 1024 * 1024,
        ),
        cost_estimate=cost,
    )(x2d)


def activation(x, activation="relu"):
    """Elementwise activation via a Pallas TPU kernel. Matches nn.ReLU / nn.GELU."""
    if activation not in ("relu", "gelu"):
        raise NotImplementedError(activation)

    orig_shape = x.shape
    orig_dtype = x.dtype
    if activation == "gelu" and not jnp.issubdtype(orig_dtype, jnp.floating):
        # PyTorch's nn.GELU rejects integer inputs; mirror that behavior.
        raise TypeError("GELU requires a floating-point input.")

    n = x.size
    if n == 0:
        return x

    two_tc, target_block_bytes = _chip_props()
    flat = x.reshape(-1)

    # ---- lane-dense 2D layout: widest cols in {2048..128} dividing n ------
    cols = None
    for w in (2048, 1024, 512, 256, 128):
        if n % w == 0:
            cols = w
            break

    if cols is not None:
        out2d = _run_2d(flat.reshape(n // cols, cols), activation,
                        two_tc, target_block_bytes)
        return out2d.reshape(orig_shape)

    # ---- unaligned size: kernel on the aligned bulk, plain jnp on the tail.
    cols = 256
    bulk = (n // cols) * cols
    if bulk == 0:
        # Tiny tensor (< 256 elements): not worth a kernel launch.
        return _eltwise_jnp(flat, activation).reshape(orig_shape)
    bulk_out = _run_2d(flat[:bulk].reshape(bulk // cols, cols), activation,
                       two_tc, target_block_bytes)
    tail_out = _eltwise_jnp(flat[bulk:], activation)
    return jnp.concatenate([bulk_out.reshape(-1), tail_out]).reshape(orig_shape)


def _ref_activation(x, kind):
    if kind == "relu":
        return jnp.maximum(x, jnp.zeros((), dtype=x.dtype))
    xf = x.astype(jnp.float32)
    return (0.5 * xf * (1.0 + lax.erf(xf / jnp.sqrt(2.0)))).astype(x.dtype)


if __name__ == "__main__":
    key = jax.random.PRNGKey(0)
    ok = True

    # Small NCHW input, like the PyTorch module would typically see.
    x_small = jax.random.normal(key, (2, 4, 16, 16), dtype=jnp.float32)
    # Larger tensor: exercises the multi-block (grid >= 2) tiled path.
    x_big = jax.random.normal(jax.random.PRNGKey(1), (8, 64, 32, 32),
                              dtype=jnp.float32)
    # bf16 input: exercises dtype-aware sublane rounding.
    x_bf16 = jax.random.normal(jax.random.PRNGKey(2), (4, 8, 32, 32),
                               dtype=jnp.bfloat16)
    # Unaligned size: exercises the bulk-kernel + jnp-tail fallback path.
    x_odd = jax.random.normal(jax.random.PRNGKey(3), (7, 999),
                              dtype=jnp.float32)
    # Tiny unaligned size: pure jnp path.
    x_tiny = jax.random.normal(jax.random.PRNGKey(4), (3, 5, 7),
                               dtype=jnp.float32)

    cases = (x_small, x_big, x_bf16, x_odd, x_tiny)
    for xin in cases:
        for kind in ("relu", "gelu"):
            out = jax.block_until_ready(activation(xin, kind))
            ref = _ref_activation(xin, kind)
            if out.shape != xin.shape or out.dtype != xin.dtype:
                ok = False
            tol = 2e-2 if xin.dtype == jnp.bfloat16 else 1e-5
            if not jnp.allclose(out.astype(jnp.float32),
                                ref.astype(jnp.float32),
                                atol=tol, rtol=tol):
                ok = False

    if ok:
        print("KERNEL_OK")
    else:
        print("KERNEL_MISMATCH")
</pallas_src>

<mosaic_0001>
module attributes {stable_mosaic.version = 11 : i64} {
  func.func @_activation_kernel(%arg0: i32, %arg1: memref<1x2048xf32, #tpu.memory_space<vmem>>, %arg2: memref<1x2048xf32, #tpu.memory_space<vmem>>) attributes {dimension_semantics = [#tpu.dimension_semantics<parallel>], iteration_bounds = array<i64: 1>, scalar_prefetch = 0 : i64, scratch_operands = 0 : i64, tpu.core_type = #tpu.core_type<tc>, window_params = [{transform_indices = @transform_0, window_bounds = array<i64: 1, 2048>}, {transform_indices = @transform_1, window_bounds = array<i64: 1, 2048>}]} {
    %c0 = arith.constant 0 : index
    %c0_0 = arith.constant 0 : index
    %0 = vector.load %arg1[%c0, %c0_0] : memref<1x2048xf32, #tpu.memory_space<vmem>>, vector<1x2048xf32>
    %cst = arith.constant 0.000000e+00 : f32
    %1 = vector.broadcast %cst : f32 to vector<1x2048xf32>
    %2 = arith.maximumf %0, %1 : vector<1x2048xf32>
    %c0_1 = arith.constant 0 : index
    %c0_2 = arith.constant 0 : index
    %3 = vector.load %arg2[%c0_1, %c0_2] : memref<1x2048xf32, #tpu.memory_space<vmem>>, vector<1x2048xf32>
    tpu.vector_store %arg2[%c0_1, %c0_2], %2 {strides = array<i32>} : memref<1x2048xf32, #tpu.memory_space<vmem>>, vector<1x2048xf32>,
    return
  }
  func.func @transform_0(%arg0: i32) -> (i32, i32) {
    %c0_i32 = arith.constant 0 : i32
    %c0_i32_0 = arith.constant 0 : i32
    return %arg0, %c0_i32 : i32, i32
  }
  func.func @transform_1(%arg0: i32) -> (i32, i32) {
    %c0_i32 = arith.constant 0 : i32
    %c0_i32_0 = arith.constant 0 : i32
    return %arg0, %c0_i32 : i32, i32
  }
}

</mosaic_0001>

<llo_original>
// kernel: tpu_custom_call.1
$region0: #{tpu_custom_call.1}
  #allocation0 [shape = 'u32[]', space=smem, size = 0x4, offset = 0x4, fixed_abs, tag = 'smem constant byte address 0x4 - core index']
  #allocation1 [shape = 'u32[72,128]{1,0:T(1,128)}', space=vmem, size = 0x9000, scoped, tag = 'internal scratch']
  %s0 = inlined_call_operand.hbm [shape: f32[1,2048], index: 0, kind: input, shape index: {}]
  %s1 = inlined_call_operand.hbm [shape: f32[1,2048], index: 1, kind: output, shape index: {}]
  %s2 = sld [smem:[#allocation0]]
  $region18: #{tpu_custom_call.1} parent=0
    _
  %s4 = ssub.s32 1, %s2
  %s5 = scalar_select 0, %s4, %s2
  $region1: #{tpu_custom_call.1} parent=0
    #allocation2 [shape = 'u8[8192]{0}', space=vmem, size = 0x2000, scoped, tag = 'input window, operand 0, single buffered']
    #allocation3 [shape = 's32[1]{0}', space=sflag, size = 0x4, scoped, tag = 'scoped memory for tpu_custom_call.1']
    #allocation4 [shape = 's32[1]{0}', space=sflag, size = 0x4, scoped, tag = 'scoped memory for tpu_custom_call.1']
    #allocation5 [shape = 'u8[8192]{0}', space=vmem, size = 0x2000, scoped, tag = 'output window, operand 0, single buffered']
    %6 = vsyncpa [#allocation3], 0
    %7 = vsyncpa [#allocation4], 0
    // Predicated region
    $region2: #{tpu_custom_call.1} parent=1 // pred_check
      _
    $region3: #{tpu_custom_call.1} parent=1 // pred_check_branch
      %9 = sbr.rel (0) target = $region5
    $region4: #{tpu_custom_call.1} parent=1 // pred_region
      %11 = vsyncadd [#allocation3], 0
      %s13 = sshll.u32 %s0, 4
      %s14 = int_to_ptr.hbm [resolvable:$true] %s13
      %s15 = sshll.u32 [#allocation2], 4
      %s16 = int_to_ptr.vmem [resolvable:$true] %s15
      %18 = dma.hbm_to_vmem [thread:$0]  %s14, 256, %s16, [#allocation3]
    $region5: #{tpu_custom_call.1} parent=1 // pred_fallthru
      _
    // Predicated region
    $region6: #{tpu_custom_call.1} parent=1 // pred_check
      _
    $region7: #{tpu_custom_call.1} parent=1 // pred_check_branch
      %20 = sbr.rel (0) target = $region9
    $region8: #{tpu_custom_call.1} parent=1 // pred_region
      %22 = dma.done [#allocation3], 256
    $region9: #{tpu_custom_call.1} parent=1 // pred_fallthru
      _
    %v23 = vld [vmem:[#allocation2] sm:$0xff]
    %v24 = vld [vmem:[#allocation2 + $0x8] sm:$0xff]
    %v25 = vmax.f32 %v23, 0.0
    %v26 = vmax.f32 %v24, 0.0
    %27 = vst [vmem:[#allocation5] sm:$0xff] %v25
    %28 = vst [vmem:[#allocation5 + $0x8] sm:$0xff] %v26
    // Predicated region
    $region10: #{tpu_custom_call.1} parent=1 // pred_check
      _
    $region11: #{tpu_custom_call.1} parent=1 // pred_check_branch
      %30 = sbr.rel (0) target = $region13
    $region12: #{tpu_custom_call.1} parent=1 // pred_region
      %32 = vsyncadd [#allocation4], 0
      %s34 = sshll.u32 [#allocation5], 4
      %s35 = int_to_ptr.vmem [resolvable:$true] %s34
      %s36 = sshll.u32 %s1, 4
      %s37 = int_to_ptr.hbm [resolvable:$true] %s36
      %39 = dma.vmem_to_hbm [thread:$0]  %s35, 256, %s37, [#allocation4]
    $region13: #{tpu_custom_call.1} parent=1 // pred_fallthru
      _
    // Predicated region
    $region14: #{tpu_custom_call.1} parent=1 // pred_check
      _
    $region15: #{tpu_custom_call.1} parent=1 // pred_check_branch
      %41 = sbr.rel (0) target = $region17
    $region16: #{tpu_custom_call.1} parent=1 // pred_region
      %43 = dma.done [#allocation4], 256
    $region17: #{tpu_custom_call.1} parent=1 // pred_fallthru
      _
    %44 = vsyncpa [#allocation3], 1
    %45 = vsyncpa [#allocation4], 1

</llo_original>
